<compile_context>
chip_gen: v7x
topology: tpu7x:2x2x1
jax: 0.10.0
libtpu: 0.0.40
codegen_flags: <defaults>
</compile_context>

<pallas_src>
import jax
import jax.numpy as jnp
from jax.experimental import pallas as pl
from jax.experimental.pallas import tpu as pltpu

# ---------------- config (small synthetic shapes) ----------------
N_INIT = 2            # num_initializations
N_VERTS = 256         # mesh vertices
REND_SIZE = 16        # ref image is REND_SIZE x REND_SIZE (square)
FEAT_HW = 8           # dino_model.feat_size (per side)
FEAT_DIM = 32         # dino feature channels
SIL_FAR = 100.0       # neural_renderer default far plane
LW_MASK = 1.0
LW_SEM = 1.0


# ---------------- fused Pallas kernel ----------------
def _fused_kernel(pose_ref, k_ref, refsum_ref,          # SMEM
                  verts_ref, sil_ref, keep_ref, ref_ref,  # VMEM
                  gt_ref, gtn_ref, w_ref, rend_ref,
                  out_ref):
    # pose_ref : (N, 12) SMEM  -- per init [R00..R22 row-major (9), t (3)]
    # k_ref    : (9,)   SMEM  -- normalized intrinsics K row-major (orig_size=1)
    # refsum_ref: (1,)  SMEM  -- sum(ref_mask)
    # verts_ref: (3, V)       -- mesh verts, xyz on sublanes, V on lanes
    # sil_ref  : (1, 1, HW)   -- this init's rendered silhouette (flattened)
    # keep_ref : (1, HW), ref_ref: (1, HW)  -- shared masks (flattened)
    # gt_ref   : (C, P)       -- gt DINO features (transposed)
    # gtn_ref  : (1, P)       -- per-patch gt feature norms (precomputed)
    # w_ref    : (1, P)       -- resized ref mask / (sum + 1e-6) (precomputed)
    # rend_ref : (1, C, P)    -- this init's rendered DINO features (transposed)
    # out_ref  : (1, 1, 128)  -- lanes [0,1,2] = [iou, sem, offscreen]
    n = pl.program_id(0)

    # --- apply_transformation: (verts @ R + t), R/t read as scalars from SMEM.
    v = verts_ref[...]                                   # (3, V)
    x, y, z = v[0:1, :], v[1:2, :], v[2:3, :]            # each (1, V)

    def cam(j):  # column j of (verts @ R) + t[j];  R[k, j] = pose[n, 3k + j]
        return (pose_ref[n, 0 + j] * x + pose_ref[n, 3 + j] * y
                + pose_ref[n, 6 + j] * z + pose_ref[n, 9 + j])

    vx, vy, vz = cam(0), cam(1), cam(2)                  # each (1, V)

    # --- mask IoU: render_mask = keep_mask * render_sil (lane-dense rows).
    sil = sil_ref[0]                                     # (1, HW)
    rm = keep_ref[...] * sil
    ref = ref_ref[...]
    inter = jnp.sum(rm * ref, axis=-1, keepdims=True)    # (1, 1)
    union = jnp.sum(rm, axis=-1, keepdims=True) + refsum_ref[0] - inter
    iou = inter / (union + 1e-6)                         # (1, 1)

    # --- 'sem': masked cosine distance, reduce over C on the sublane axis.
    gt = gt_ref[...]                                     # (C, P)
    rd = rend_ref[0]                                     # (C, P)
    dot = jnp.sum(gt * rd, axis=0, keepdims=True)        # (1, P)
    n_rd = jnp.sqrt(jnp.sum(rd * rd, axis=0, keepdims=True))
    cos = dot / (gtn_ref[...] * n_rd + 1e-6)
    sem = jnp.sum(w_ref[...] * (1.0 - cos), axis=-1, keepdims=True)   # (1, 1)

    # --- offscreen: nr.projection with R=I, t=0, dist=0, orig_size=1, eps=1e-9.
    inv_z = pl.reciprocal(vz + 1e-9)                     # eps matches nr.projection
    xp = vx * inv_z
    yp = vy * inv_z
    u = k_ref[0] * xp + k_ref[1] * yp + k_ref[2]
    vv = 1.0 - (k_ref[3] * xp + k_ref[4] * yp + k_ref[5])
    u = 2.0 * (u - 0.5)
    vv = 2.0 * (vv - 0.5)
    zero = jnp.zeros_like(u)
    off_terms = (jnp.maximum(u - 1.0, zero) + jnp.maximum(vv - 1.0, zero)
                 + jnp.maximum(-1.0 - u, zero) + jnp.maximum(-1.0 - vv, zero)
                 + jnp.maximum(-vz, zero) + jnp.maximum(vz - SIL_FAR, zero))
    off = jnp.sum(off_terms, axis=-1, keepdims=True)     # (1, 1)

    # --- pack the three scalars into one lane-dense 128-wide row.
    lane = jax.lax.broadcasted_iota(jnp.int32, (1, 128), 1)
    zeros_row = jnp.zeros((1, 128), jnp.float32)
    row = (jnp.where(lane == 0, iou, zeros_row)
           + jnp.where(lane == 1, sem, zeros_row)
           + jnp.where(lane == 2, off, zeros_row))
    out_ref[0] = row


# ---------------- pallas_call wrapper ----------------
def fused_pose_losses(pose, k_flat, ref_sum, verts_t, sil_flat, keep_flat,
                      ref_flat, gt_t, gt_norm, w_norm, rend_t):
    """Returns (iou, sem, offscreen), each shape (N,)."""
    N = pose.shape[0]
    V = verts_t.shape[1]
    HW = keep_flat.shape[1]
    C, P = gt_t.shape
    smem = pltpu.MemorySpace.SMEM
    out = pl.pallas_call(
        _fused_kernel,
        out_shape=jax.ShapeDtypeStruct((N, 1, 128), jnp.float32),
        grid=(N,),
        in_specs=[
            pl.BlockSpec(memory_space=smem),                     # pose (N, 12)
            pl.BlockSpec(memory_space=smem),                     # K flat (9,)
            pl.BlockSpec(memory_space=smem),                     # ref_sum (1,)
            pl.BlockSpec((3, V), lambda n: (0, 0)),              # verts_t
            pl.BlockSpec((1, 1, HW), lambda n: (n, 0, 0)),       # render_sil
            pl.BlockSpec((1, HW), lambda n: (0, 0)),             # keep_mask
            pl.BlockSpec((1, HW), lambda n: (0, 0)),             # ref_mask
            pl.BlockSpec((C, P), lambda n: (0, 0)),              # gt feats (C,P)
            pl.BlockSpec((1, P), lambda n: (0, 0)),              # gt norms
            pl.BlockSpec((1, P), lambda n: (0, 0)),              # mask weights
            pl.BlockSpec((1, C, P), lambda n: (n, 0, 0)),        # rendered feats
        ],
        out_specs=pl.BlockSpec((1, 1, 128), lambda n: (n, 0, 0)),
        compiler_params=pltpu.CompilerParams(
            dimension_semantics=("parallel",)),
    )(pose, k_flat, ref_sum, verts_t, sil_flat, keep_flat, ref_flat,
      gt_t, gt_norm, w_norm, rend_t)
    return out[:, 0, 0], out[:, 0, 1], out[:, 0, 2]


# ---------------- plain-JAX glue ----------------
def rot6d_to_matrix(rot6d):
    r = rot6d.reshape(-1, 3, 2)
    a1, a2 = r[:, :, 0], r[:, :, 1]
    b1 = a1 / jnp.maximum(jnp.linalg.norm(a1, axis=-1, keepdims=True), 1e-12)
    b2 = a2 - jnp.sum(b1 * a2, axis=-1, keepdims=True) * b1
    b2 = b2 / jnp.maximum(jnp.linalg.norm(b2, axis=-1, keepdims=True), 1e-12)
    b3 = jnp.cross(b1, b2)
    return jnp.stack([b1, b2, b3], axis=-1)   # (N, 3, 3)


def nearest_resize(mask, out_hw):
    # F.interpolate(mode='nearest') semantics: src = floor(dst * in / out)
    _, H, W = mask.shape
    oh, ow = out_hw
    hi = (jnp.arange(oh) * H) // oh
    wi = (jnp.arange(ow) * W) // ow
    return mask[:, hi[:, None], wi[None, :]]


class ObjTracker:
    """JAX/Pallas port of the numeric core of ObjTracker.forward()."""

    def __init__(self, ref_image, vertices, gt_dino_feat, rotation_init,
                 translation_init, K, num_initializations=1,
                 lw_mask=LW_MASK, lw_sem=LW_SEM, feat_hw=FEAT_HW):
        assert ref_image.shape[0] == ref_image.shape[1], "Must be square."
        N = num_initializations
        H = ref_image.shape[0]
        self.num_init = N
        self.vertices_t = jnp.asarray(vertices, jnp.float32).T            # (3, V)

        ref_mask = (jnp.asarray(ref_image) > 0).astype(jnp.float32)       # (H, W)
        keep_mask = (jnp.asarray(ref_image) >= 0).astype(jnp.float32)
        # lane-dense flat rows, shared across inits (no host-side tiling to N)
        self.ref_flat = ref_mask.reshape(1, H * H)
        self.keep_flat = keep_mask.reshape(1, H * H)
        self.ref_sum = jnp.sum(ref_mask).reshape(1)                       # (1,)

        # DINO constants: (C, P) layout, per-patch norms, normalized mask weights
        gt = jnp.asarray(gt_dino_feat, jnp.float32)[0]                    # (P, C)
        self.gt_t = jnp.transpose(gt)                                     # (C, P)
        self.gt_norm = jnp.sqrt(jnp.sum(gt * gt, axis=-1))[None, :]       # (1, P)
        w = nearest_resize(ref_mask[None], (feat_hw, feat_hw)).reshape(1, -1)
        self.w_norm = w / (jnp.sum(w, axis=-1, keepdims=True) + 1e-6)     # (1, P)

        self.rotations = jnp.asarray(rotation_init, jnp.float32)          # (N, 6)
        t = jnp.asarray(translation_init, jnp.float32)
        if t.shape[0] != self.rotations.shape[0]:
            t = jnp.tile(t, (N, 1, 1))
        self.translations = t                                             # (N, 1, 3)
        self.K_flat = jnp.asarray(K, jnp.float32)[0].reshape(9)           # normalized K
        self.lw_mask = lw_mask
        self.lw_sem = lw_sem

    def apply_transformation(self):
        # Convenience (pure JAX); forward() recomputes this inside the fused kernel.
        rots = rot6d_to_matrix(self.rotations)                            # (N, 3, 3)
        verts = jnp.einsum('kv,nkj->njv', self.vertices_t, rots)
        return verts + jnp.transpose(self.translations, (0, 2, 1))        # (N, 3, V)

    def forward(self, render_sil, rendered_dino_feat):
        # TODO(synk): render_sil comes from the neural_renderer silhouette
        # rasterizer and rendered_dino_feat from PyTorch3D render + bicubic
        # resize + DINO feature extraction; no Pallas equivalent, so their
        # outputs are supplied as inputs here.
        N, H, _ = render_sil.shape
        rots = rot6d_to_matrix(self.rotations)
        pose = jnp.concatenate(
            [rots.reshape(N, 9), self.translations.reshape(N, 3)], axis=-1)  # (N, 12)
        sil_flat = render_sil.reshape(N, 1, H * H)
        rend_t = jnp.transpose(rendered_dino_feat, (0, 2, 1))                # (N, C, P)

        iou, sem, off = fused_pose_losses(
            pose, self.K_flat, self.ref_sum, self.vertices_t, sil_flat,
            self.keep_flat, self.ref_flat, self.gt_t, self.gt_norm,
            self.w_norm, rend_t)

        loss_dict = {
            "iou": 1.0 - iou,
            "sem": self.lw_sem * sem,
            "offscreen": 100000.0 * off,
        }
        return loss_dict, iou


# ---------------- demo ----------------
if __name__ == "__main__":
    key = jax.random.PRNGKey(0)
    k = jax.random.split(key, 8)
    N, V, H = N_INIT, N_VERTS, REND_SIZE
    P, C = FEAT_HW * FEAT_HW, FEAT_DIM

    ref_image = jax.random.uniform(k[0], (H, H), minval=-1.0, maxval=1.0)
    vertices = 0.1 * jax.random.normal(k[1], (V, 3), dtype=jnp.float32)
    gt_dino_feat = jax.random.normal(k[2], (1, P, C), dtype=jnp.float32)
    rotation_init = (jnp.tile(jnp.array([1., 0., 0., 0., 1., 0.], jnp.float32), (N, 1))
                     + 0.01 * jax.random.normal(k[3], (N, 6), dtype=jnp.float32))
    translation_init = (jnp.tile(jnp.array([[[0., 0., 2.5]]], jnp.float32), (N, 1, 1))
                        + 0.01 * jax.random.normal(k[4], (N, 1, 3), dtype=jnp.float32))
    K = jnp.array([[[1.0, 0.0, 0.5],
                    [0.0, 1.0, 0.5],
                    [0.0, 0.0, 1.0]]], jnp.float32)   # normalized intrinsics

    tracker = ObjTracker(ref_image, vertices, gt_dino_feat, rotation_init,
                         translation_init, K, num_initializations=N)

    # Stand-ins for the external renderer / DINO outputs (see TODO(synk) above).
    render_sil = jax.random.uniform(k[5], (N, H, H), dtype=jnp.float32)
    rendered_dino_feat = jax.random.normal(k[6], (N, P, C), dtype=jnp.float32)

    loss_dict, iou = tracker.forward(render_sil, rendered_dino_feat)
    jax.block_until_ready((loss_dict, iou))
    print("KERNEL_OK")
</pallas_src>

<mosaic_0001>
module attributes {stable_mosaic.version = 11 : i64} {
  func.func @_fused_kernel(%arg0: i32, %arg1: memref<2x12xf32, #tpu.memory_space<smem>>, %arg2: memref<9xf32, #tpu.memory_space<smem>>, %arg3: memref<1xf32, #tpu.memory_space<smem>>, %arg4: memref<3x256xf32, #tpu.memory_space<vmem>>, %arg5: memref<1x1x256xf32, #tpu.memory_space<vmem>>, %arg6: memref<1x256xf32, #tpu.memory_space<vmem>>, %arg7: memref<1x256xf32, #tpu.memory_space<vmem>>, %arg8: memref<32x64xf32, #tpu.memory_space<vmem>>, %arg9: memref<1x64xf32, #tpu.memory_space<vmem>>, %arg10: memref<1x64xf32, #tpu.memory_space<vmem>>, %arg11: memref<1x32x64xf32, #tpu.memory_space<vmem>>, %arg12: memref<1x1x128xf32, #tpu.memory_space<vmem>>) attributes {dimension_semantics = [#tpu.dimension_semantics<parallel>], iteration_bounds = array<i64: 2>, scalar_prefetch = 0 : i64, scratch_operands = 0 : i64, tpu.core_type = #tpu.core_type<tc>, window_params = [{transform_indices = @transform_0, window_bounds = array<i64: 2, 12>}, {transform_indices = @transform_1, window_bounds = array<i64: 9>}, {transform_indices = @transform_2, window_bounds = array<i64: 1>}, {pipeline_mode = #tpu.pipeline_mode<synchronous>, transform_indices = @transform_3, window_bounds = array<i64: 3, 256>}, {transform_indices = @transform_4, window_bounds = array<i64: 1, 1, 256>}, {pipeline_mode = #tpu.pipeline_mode<synchronous>, transform_indices = @transform_5, window_bounds = array<i64: 1, 256>}, {pipeline_mode = #tpu.pipeline_mode<synchronous>, transform_indices = @transform_6, window_bounds = array<i64: 1, 256>}, {pipeline_mode = #tpu.pipeline_mode<synchronous>, transform_indices = @transform_7, window_bounds = array<i64: 32, 64>}, {pipeline_mode = #tpu.pipeline_mode<synchronous>, transform_indices = @transform_8, window_bounds = array<i64: 1, 64>}, {pipeline_mode = #tpu.pipeline_mode<synchronous>, transform_indices = @transform_9, window_bounds = array<i64: 1, 64>}, {transform_indices = @transform_10, window_bounds = array<i64: 1, 32, 64>}, {transform_indices = @transform_11, window_bounds = array<i64: 1, 1, 128>}]} {
    %c0 = arith.constant 0 : index
    %c0_0 = arith.constant 0 : index
    %0 = vector.load %arg4[%c0, %c0_0] : memref<3x256xf32, #tpu.memory_space<vmem>>, vector<3x256xf32>
    %1 = vector.extract_strided_slice %0 {offsets = [0, 0], sizes = [1, 256], strides = [1, 1]} : vector<3x256xf32> to vector<1x256xf32>
    %2 = vector.extract_strided_slice %0 {offsets = [1, 0], sizes = [1, 256], strides = [1, 1]} : vector<3x256xf32> to vector<1x256xf32>
    %3 = vector.extract_strided_slice %0 {offsets = [2, 0], sizes = [1, 256], strides = [1, 1]} : vector<3x256xf32> to vector<1x256xf32>
    %4 = arith.index_cast %arg0 : i32 to index
    %c0_1 = arith.constant 0 : index
    %5 = memref.load %arg1[%4, %c0_1] : memref<2x12xf32, #tpu.memory_space<smem>>
    %6 = vector.broadcast %5 : f32 to vector<1x256xf32>
    %7 = arith.mulf %6, %1 : vector<1x256xf32>
    %8 = arith.index_cast %arg0 : i32 to index
    %c3 = arith.constant 3 : index
    %9 = memref.load %arg1[%8, %c3] : memref<2x12xf32, #tpu.memory_space<smem>>
    %10 = vector.broadcast %9 : f32 to vector<1x256xf32>
    %11 = arith.mulf %10, %2 : vector<1x256xf32>
    %12 = arith.addf %7, %11 : vector<1x256xf32>
    %13 = arith.index_cast %arg0 : i32 to index
    %c6 = arith.constant 6 : index
    %14 = memref.load %arg1[%13, %c6] : memref<2x12xf32, #tpu.memory_space<smem>>
    %15 = vector.broadcast %14 : f32 to vector<1x256xf32>
    %16 = arith.mulf %15, %3 : vector<1x256xf32>
    %17 = arith.addf %12, %16 : vector<1x256xf32>
    %18 = arith.index_cast %arg0 : i32 to index
    %c9 = arith.constant 9 : index
    %19 = memref.load %arg1[%18, %c9] : memref<2x12xf32, #tpu.memory_space<smem>>
    %20 = vector.broadcast %19 : f32 to vector<1x256xf32>
    %21 = arith.addf %17, %20 : vector<1x256xf32>
    %22 = arith.index_cast %arg0 : i32 to index
    %c1 = arith.constant 1 : index
    %23 = memref.load %arg1[%22, %c1] : memref<2x12xf32, #tpu.memory_space<smem>>
    %24 = vector.broadcast %23 : f32 to vector<1x256xf32>
    %25 = arith.mulf %24, %1 : vector<1x256xf32>
    %26 = arith.index_cast %arg0 : i32 to index
    %c4 = arith.constant 4 : index
    %27 = memref.load %arg1[%26, %c4] : memref<2x12xf32, #tpu.memory_space<smem>>
    %28 = vector.broadcast %27 : f32 to vector<1x256xf32>
    %29 = arith.mulf %28, %2 : vector<1x256xf32>
    %30 = arith.addf %25, %29 : vector<1x256xf32>
    %31 = arith.index_cast %arg0 : i32 to index
    %c7 = arith.constant 7 : index
    %32 = memref.load %arg1[%31, %c7] : memref<2x12xf32, #tpu.memory_space<smem>>
    %33 = vector.broadcast %32 : f32 to vector<1x256xf32>
    %34 = arith.mulf %33, %3 : vector<1x256xf32>
    %35 = arith.addf %30, %34 : vector<1x256xf32>
    %36 = arith.index_cast %arg0 : i32 to index
    %c10 = arith.constant 10 : index
    %37 = memref.load %arg1[%36, %c10] : memref<2x12xf32, #tpu.memory_space<smem>>
    %38 = vector.broadcast %37 : f32 to vector<1x256xf32>
    %39 = arith.addf %35, %38 : vector<1x256xf32>
    %40 = arith.index_cast %arg0 : i32 to index
    %c2 = arith.constant 2 : index
    %41 = memref.load %arg1[%40, %c2] : memref<2x12xf32, #tpu.memory_space<smem>>
    %42 = vector.broadcast %41 : f32 to vector<1x256xf32>
    %43 = arith.mulf %42, %1 : vector<1x256xf32>
    %44 = arith.index_cast %arg0 : i32 to index
    %c5 = arith.constant 5 : index
    %45 = memref.load %arg1[%44, %c5] : memref<2x12xf32, #tpu.memory_space<smem>>
    %46 = vector.broadcast %45 : f32 to vector<1x256xf32>
    %47 = arith.mulf %46, %2 : vector<1x256xf32>
    %48 = arith.addf %43, %47 : vector<1x256xf32>
    %49 = arith.index_cast %arg0 : i32 to index
    %c8 = arith.constant 8 : index
    %50 = memref.load %arg1[%49, %c8] : memref<2x12xf32, #tpu.memory_space<smem>>
    %51 = vector.broadcast %50 : f32 to vector<1x256xf32>
    %52 = arith.mulf %51, %3 : vector<1x256xf32>
    %53 = arith.addf %48, %52 : vector<1x256xf32>
    %54 = arith.index_cast %arg0 : i32 to index
    %c11 = arith.constant 11 : index
    %55 = memref.load %arg1[%54, %c11] : memref<2x12xf32, #tpu.memory_space<smem>>
    %56 = vector.broadcast %55 : f32 to vector<1x256xf32>
    %57 = arith.addf %53, %56 : vector<1x256xf32>
    %c0_2 = arith.constant 0 : index
    %c0_3 = arith.constant 0 : index
    %c0_4 = arith.constant 0 : index
    %58 = vector.load %arg5[%c0_2, %c0_3, %c0_4] : memref<1x1x256xf32, #tpu.memory_space<vmem>>, vector<1x1x256xf32>
    %59 = vector.shape_cast %58 : vector<1x1x256xf32> to vector<1x256xf32>
    %c0_5 = arith.constant 0 : index
    %c0_6 = arith.constant 0 : index
    %60 = vector.load %arg6[%c0_5, %c0_6] : memref<1x256xf32, #tpu.memory_space<vmem>>, vector<1x256xf32>
    %61 = arith.mulf %60, %59 : vector<1x256xf32>
    %c0_7 = arith.constant 0 : index
    %c0_8 = arith.constant 0 : index
    %62 = vector.load %arg7[%c0_7, %c0_8] : memref<1x256xf32, #tpu.memory_space<vmem>>, vector<1x256xf32>
    %63 = arith.mulf %61, %62 : vector<1x256xf32>
    %cst = arith.constant dense<0.000000e+00> : vector<1xf32>
    %64 = vector.multi_reduction <add>, %63, %cst [1] : vector<1x256xf32> to vector<1xf32>
    %65 = vector.shape_cast %64 : vector<1xf32> to vector<1x1xf32>
    %cst_9 = arith.constant dense<0.000000e+00> : vector<1xf32>
    %66 = vector.multi_reduction <add>, %61, %cst_9 [1] : vector<1x256xf32> to vector<1xf32>
    %67 = vector.shape_cast %66 : vector<1xf32> to vector<1x1xf32>
    %c0_10 = arith.constant 0 : index
    %68 = memref.load %arg3[%c0_10] : memref<1xf32, #tpu.memory_space<smem>>
    %69 = vector.broadcast %68 : f32 to vector<1x1xf32>
    %70 = arith.addf %67, %69 : vector<1x1xf32>
    %71 = arith.subf %70, %65 : vector<1x1xf32>
    %cst_11 = arith.constant 9.99999997E-7 : f32
    %72 = vector.broadcast %cst_11 : f32 to vector<1x1xf32>
    %73 = arith.addf %71, %72 : vector<1x1xf32>
    %74 = arith.divf %65, %73 : vector<1x1xf32>
    %c0_12 = arith.constant 0 : index
    %c0_13 = arith.constant 0 : index
    %75 = vector.load %arg8[%c0_12, %c0_13] : memref<32x64xf32, #tpu.memory_space<vmem>>, vector<32x64xf32>
    %c0_14 = arith.constant 0 : index
    %c0_15 = arith.constant 0 : index
    %c0_16 = arith.constant 0 : index
    %76 = vector.load %arg11[%c0_14, %c0_15, %c0_16] : memref<1x32x64xf32, #tpu.memory_space<vmem>>, vector<1x32x64xf32>
    %77 = vector.shape_cast %76 : vector<1x32x64xf32> to vector<32x64xf32>
    %78 = arith.mulf %75, %77 : vector<32x64xf32>
    %cst_17 = arith.constant dense<0.000000e+00> : vector<64xf32>
    %79 = vector.multi_reduction <add>, %78, %cst_17 [0] : vector<32x64xf32> to vector<64xf32>
    %80 = vector.shape_cast %79 : vector<64xf32> to vector<1x64xf32>
    %81 = arith.mulf %77, %77 : vector<32x64xf32>
    %cst_18 = arith.constant dense<0.000000e+00> : vector<64xf32>
    %82 = vector.multi_reduction <add>, %81, %cst_18 [0] : vector<32x64xf32> to vector<64xf32>
    %83 = vector.shape_cast %82 : vector<64xf32> to vector<1x64xf32>
    %84 = math.sqrt %83 : vector<1x64xf32>
    %c0_19 = arith.constant 0 : index
    %c0_20 = arith.constant 0 : index
    %85 = vector.load %arg9[%c0_19, %c0_20] : memref<1x64xf32, #tpu.memory_space<vmem>>, vector<1x64xf32>
    %86 = arith.mulf %85, %84 : vector<1x64xf32>
    %cst_21 = arith.constant 9.99999997E-7 : f32
    %87 = vector.broadcast %cst_21 : f32 to vector<1x64xf32>
    %88 = arith.addf %86, %87 : vector<1x64xf32>
    %89 = arith.divf %80, %88 : vector<1x64xf32>
    %c0_22 = arith.constant 0 : index
    %c0_23 = arith.constant 0 : index
    %90 = vector.load %arg10[%c0_22, %c0_23] : memref<1x64xf32, #tpu.memory_space<vmem>>, vector<1x64xf32>
    %cst_24 = arith.constant 1.000000e+00 : f32
    %91 = vector.broadcast %cst_24 : f32 to vector<1x64xf32>
    %92 = arith.subf %91, %89 : vector<1x64xf32>
    %93 = arith.mulf %90, %92 : vector<1x64xf32>
    %cst_25 = arith.constant dense<0.000000e+00> : vector<1xf32>
    %94 = vector.multi_reduction <add>, %93, %cst_25 [1] : vector<1x64xf32> to vector<1xf32>
    %95 = vector.shape_cast %94 : vector<1xf32> to vector<1x1xf32>
    %cst_26 = arith.constant 9.99999971E-10 : f32
    %96 = vector.broadcast %cst_26 : f32 to vector<1x256xf32>
    %97 = arith.addf %57, %96 : vector<1x256xf32>
    %98 = tpu.reciprocal %97 : vector<1x256xf32> -> vector<1x256xf32>
    %99 = arith.mulf %21, %98 : vector<1x256xf32>
    %100 = arith.mulf %39, %98 : vector<1x256xf32>
    %c0_27 = arith.constant 0 : index
    %101 = memref.load %arg2[%c0_27] : memref<9xf32, #tpu.memory_space<smem>>
    %102 = vector.broadcast %101 : f32 to vector<1x256xf32>
    %103 = arith.mulf %102, %99 : vector<1x256xf32>
    %c1_28 = arith.constant 1 : index
    %104 = memref.load %arg2[%c1_28] : memref<9xf32, #tpu.memory_space<smem>>
    %105 = vector.broadcast %104 : f32 to vector<1x256xf32>
    %106 = arith.mulf %105, %100 : vector<1x256xf32>
    %107 = arith.addf %103, %106 : vector<1x256xf32>
    %c2_29 = arith.constant 2 : index
    %108 = memref.load %arg2[%c2_29] : memref<9xf32, #tpu.memory_space<smem>>
    %109 = vector.broadcast %108 : f32 to vector<1x256xf32>
    %110 = arith.addf %107, %109 : vector<1x256xf32>
    %c3_30 = arith.constant 3 : index
    %111 = memref.load %arg2[%c3_30] : memref<9xf32, #tpu.memory_space<smem>>
    %112 = vector.broadcast %111 : f32 to vector<1x256xf32>
    %113 = arith.mulf %112, %99 : vector<1x256xf32>
    %c4_31 = arith.constant 4 : index
    %114 = memref.load %arg2[%c4_31] : memref<9xf32, #tpu.memory_space<smem>>
    %115 = vector.broadcast %114 : f32 to vector<1x256xf32>
    %116 = arith.mulf %115, %100 : vector<1x256xf32>
    %117 = arith.addf %113, %116 : vector<1x256xf32>
    %c5_32 = arith.constant 5 : index
    %118 = memref.load %arg2[%c5_32] : memref<9xf32, #tpu.memory_space<smem>>
    %119 = vector.broadcast %118 : f32 to vector<1x256xf32>
    %120 = arith.addf %117, %119 : vector<1x256xf32>
    %cst_33 = arith.constant 1.000000e+00 : f32
    %121 = vector.broadcast %cst_33 : f32 to vector<1x256xf32>
    %122 = arith.subf %121, %120 : vector<1x256xf32>
    %cst_34 = arith.constant 5.000000e-01 : f32
    %123 = vector.broadcast %cst_34 : f32 to vector<1x256xf32>
    %124 = arith.subf %110, %123 : vector<1x256xf32>
    %cst_35 = arith.constant 2.000000e+00 : f32
    %125 = vector.broadcast %cst_35 : f32 to vector<1x256xf32>
    %126 = arith.mulf %125, %124 : vector<1x256xf32>
    %cst_36 = arith.constant 5.000000e-01 : f32
    %127 = vector.broadcast %cst_36 : f32 to vector<1x256xf32>
    %128 = arith.subf %122, %127 : vector<1x256xf32>
    %cst_37 = arith.constant 2.000000e+00 : f32
    %129 = vector.broadcast %cst_37 : f32 to vector<1x256xf32>
    %130 = arith.mulf %129, %128 : vector<1x256xf32>
    %cst_38 = arith.constant 0.000000e+00 : f32
    %131 = vector.broadcast %cst_38 : f32 to vector<1x256xf32>
    %cst_39 = arith.constant 1.000000e+00 : f32
    %132 = vector.broadcast %cst_39 : f32 to vector<1x256xf32>
    %133 = arith.subf %126, %132 : vector<1x256xf32>
    %134 = arith.maximumf %133, %131 : vector<1x256xf32>
    %cst_40 = arith.constant 1.000000e+00 : f32
    %135 = vector.broadcast %cst_40 : f32 to vector<1x256xf32>
    %136 = arith.subf %130, %135 : vector<1x256xf32>
    %137 = arith.maximumf %136, %131 : vector<1x256xf32>
    %138 = arith.addf %134, %137 : vector<1x256xf32>
    %cst_41 = arith.constant -1.000000e+00 : f32
    %139 = vector.broadcast %cst_41 : f32 to vector<1x256xf32>
    %140 = arith.subf %139, %126 : vector<1x256xf32>
    %141 = arith.maximumf %140, %131 : vector<1x256xf32>
    %142 = arith.addf %138, %141 : vector<1x256xf32>
    %cst_42 = arith.constant -1.000000e+00 : f32
    %143 = vector.broadcast %cst_42 : f32 to vector<1x256xf32>
    %144 = arith.subf %143, %130 : vector<1x256xf32>
    %145 = arith.maximumf %144, %131 : vector<1x256xf32>
    %146 = arith.addf %142, %145 : vector<1x256xf32>
    %cst_43 = arith.constant 0.000000e+00 : f32
    %147 = vector.broadcast %cst_43 : f32 to vector<1x256xf32>
    %148 = arith.subf %147, %57 : vector<1x256xf32>
    %149 = arith.maximumf %148, %131 : vector<1x256xf32>
    %150 = arith.addf %146, %149 : vector<1x256xf32>
    %cst_44 = arith.constant 1.000000e+02 : f32
    %151 = vector.broadcast %cst_44 : f32 to vector<1x256xf32>
    %152 = arith.subf %57, %151 : vector<1x256xf32>
    %153 = arith.maximumf %152, %131 : vector<1x256xf32>
    %154 = arith.addf %150, %153 : vector<1x256xf32>
    %cst_45 = arith.constant dense<0.000000e+00> : vector<1xf32>
    %155 = vector.multi_reduction <add>, %154, %cst_45 [1] : vector<1x256xf32> to vector<1xf32>
    %156 = vector.shape_cast %155 : vector<1xf32> to vector<1x1xf32>
    %157 = tpu.iota {dimensions = array<i32: 1>} : vector<1x128xi32>
    %cst_46 = arith.constant 0.000000e+00 : f32
    %158 = vector.broadcast %cst_46 : f32 to vector<1x128xf32>
    %c0_i32 = arith.constant 0 : i32
    %159 = vector.broadcast %c0_i32 : i32 to vector<1x128xi32>
    %160 = arith.cmpi eq, %157, %159 : vector<1x128xi32>
    %161 = vector.shape_cast %74 : vector<1x1xf32> to vector<1x1xf32>
    %162 = vector.broadcast %161 : vector<1x1xf32> to vector<1x128xf32>
    %163 = arith.select %160, %162, %158 : vector<1x128xi1>, vector<1x128xf32>
    %c1_i32 = arith.constant 1 : i32
    %164 = vector.broadcast %c1_i32 : i32 to vector<1x128xi32>
    %165 = arith.cmpi eq, %157, %164 : vector<1x128xi32>
    %166 = vector.shape_cast %95 : vector<1x1xf32> to vector<1x1xf32>
    %167 = vector.broadcast %166 : vector<1x1xf32> to vector<1x128xf32>
    %168 = arith.select %165, %167, %158 : vector<1x128xi1>, vector<1x128xf32>
    %169 = arith.addf %163, %168 : vector<1x128xf32>
    %c2_i32 = arith.constant 2 : i32
    %170 = vector.broadcast %c2_i32 : i32 to vector<1x128xi32>
    %171 = arith.cmpi eq, %157, %170 : vector<1x128xi32>
    %172 = vector.shape_cast %156 : vector<1x1xf32> to vector<1x1xf32>
    %173 = vector.broadcast %172 : vector<1x1xf32> to vector<1x128xf32>
    %174 = arith.select %171, %173, %158 : vector<1x128xi1>, vector<1x128xf32>
    %175 = arith.addf %169, %174 : vector<1x128xf32>
    %c0_47 = arith.constant 0 : index
    %c0_48 = arith.constant 0 : index
    %c0_49 = arith.constant 0 : index
    %176 = vector.load %arg12[%c0_47, %c0_48, %c0_49] : memref<1x1x128xf32, #tpu.memory_space<vmem>>, vector<1x1x128xf32>
    %177 = vector.shape_cast %176 : vector<1x1x128xf32> to vector<1x128xf32>
    %178 = vector.shape_cast %175 : vector<1x128xf32> to vector<1x1x128xf32>
    tpu.vector_store %arg12[%c0_47, %c0_48, %c0_49], %178 {strides = array<i32>} : memref<1x1x128xf32, #tpu.memory_space<vmem>>, vector<1x1x128xf32>,
    return
  }
  func.func @transform_0(%arg0: i32) -> (i32, i32) {
    %c0_i32 = arith.constant 0 : i32
    %c0_i32_0 = arith.constant 0 : i32
    %c0_i32_1 = arith.constant 0 : i32
    return %c0_i32, %c0_i32_0 : i32, i32
  }
  func.func @transform_1(%arg0: i32) -> i32 {
    %c0_i32 = arith.constant 0 : i32
    %c0_i32_0 = arith.constant 0 : i32
    return %c0_i32 : i32
  }
  func.func @transform_2(%arg0: i32) -> i32 {
    %c0_i32 = arith.constant 0 : i32
    %c0_i32_0 = arith.constant 0 : i32
    return %c0_i32 : i32
  }
  func.func @transform_3(%arg0: i32) -> (i32, i32) {
    %c0_i32 = arith.constant 0 : i32
    %c0_i32_0 = arith.constant 0 : i32
    %c0_i32_1 = arith.constant 0 : i32
    return %c0_i32, %c0_i32_0 : i32, i32
  }
  func.func @transform_4(%arg0: i32) -> (i32, i32, i32) {
    %c0_i32 = arith.constant 0 : i32
    %c0_i32_0 = arith.constant 0 : i32
    %c0_i32_1 = arith.constant 0 : i32
    return %arg0, %c0_i32, %c0_i32_0 : i32, i32, i32
  }
  func.func @transform_5(%arg0: i32) -> (i32, i32) {
    %c0_i32 = arith.constant 0 : i32
    %c0_i32_0 = arith.constant 0 : i32
    %c0_i32_1 = arith.constant 0 : i32
    return %c0_i32, %c0_i32_0 : i32, i32
  }
  func.func @transform_6(%arg0: i32) -> (i32, i32) {
    %c0_i32 = arith.constant 0 : i32
    %c0_i32_0 = arith.constant 0 : i32
    %c0_i32_1 = arith.constant 0 : i32
    return %c0_i32, %c0_i32_0 : i32, i32
  }
  func.func @transform_7(%arg0: i32) -> (i32, i32) {
    %c0_i32 = arith.constant 0 : i32
    %c0_i32_0 = arith.constant 0 : i32
    %c0_i32_1 = arith.constant 0 : i32
    return %c0_i32, %c0_i32_0 : i32, i32
  }
  func.func @transform_8(%arg0: i32) -> (i32, i32) {
    %c0_i32 = arith.constant 0 : i32
    %c0_i32_0 = arith.constant 0 : i32
    %c0_i32_1 = arith.constant 0 : i32
    return %c0_i32, %c0_i32_0 : i32, i32
  }
  func.func @transform_9(%arg0: i32) -> (i32, i32) {
    %c0_i32 = arith.constant 0 : i32
    %c0_i32_0 = arith.constant 0 : i32
    %c0_i32_1 = arith.constant 0 : i32
    return %c0_i32, %c0_i32_0 : i32, i32
  }
  func.func @transform_10(%arg0: i32) -> (i32, i32, i32) {
    %c0_i32 = arith.constant 0 : i32
    %c0_i32_0 = arith.constant 0 : i32
    %c0_i32_1 = arith.constant 0 : i32
    return %arg0, %c0_i32, %c0_i32_0 : i32, i32, i32
  }
  func.func @transform_11(%arg0: i32) -> (i32, i32, i32) {
    %c0_i32 = arith.constant 0 : i32
    %c0_i32_0 = arith.constant 0 : i32
    %c0_i32_1 = arith.constant 0 : i32
    return %arg0, %c0_i32, %c0_i32_0 : i32, i32, i32
  }
}

</mosaic_0001>

<llo_original>
// kernel: tpu_custom_call.1
$region0: #{tpu_custom_call.1}
  #allocation0 [shape = 'u32[]', space=smem, size = 0x4, offset = 0x4, fixed_abs, tag = 'smem constant byte address 0x4 - core index']
  #allocation1 [shape = 'u32[144,128]{1,0:T(1,128)}', space=vmem, size = 0x12000, scoped, tag = 'internal scratch']
  #allocation2 [shape = 'f32[1]{0:T(128)S(6)}', space=smem, size = 0x200, scoped, tag = 'scoped memory for tpu_custom_call.1']
  %s0 = inlined_call_operand.vmem [shape: f32[2,12], index: 0, kind: input, shape index: {}]
  %s1 = inlined_call_operand.hbm [shape: f32[9], index: 1, kind: input, shape index: {}]
  %s2 = inlined_call_operand.<no memory space> [shape: f32[1], index: 2, kind: input, shape index: {}]
  %s3 = inlined_call_operand.vmem [shape: f32[3,256], index: 3, kind: input, shape index: {}]
  %s4 = inlined_call_operand.vmem [shape: f32[2,1,256], index: 4, kind: input, shape index: {}]
  %s5 = inlined_call_operand.vmem [shape: f32[1,256], index: 5, kind: input, shape index: {}]
  %s6 = inlined_call_operand.vmem [shape: f32[1,256], index: 6, kind: input, shape index: {}]
  %s7 = inlined_call_operand.hbm [shape: f32[32,64], index: 7, kind: input, shape index: {}]
  %s8 = inlined_call_operand.vmem [shape: f32[1,64], index: 8, kind: input, shape index: {}]
  %s9 = inlined_call_operand.vmem [shape: f32[1,64], index: 9, kind: input, shape index: {}]
  %s10 = inlined_call_operand.hbm [shape: f32[2,32,64], index: 10, kind: input, shape index: {}]
  %s11 = inlined_call_operand.hbm [shape: f32[2,1,128], index: 11, kind: output, shape index: {}]
  %s12 = sld [smem:[#allocation0]]
  $region93: #{tpu_custom_call.1} parent=0
    _
  %s14 = ssub.s32 1, %s12
  %s15 = scalar_select 0, %s14, %s12
  %16 = sst [smem:[#allocation2]] %s2
  $region1: #{tpu_custom_call.1} parent=0
    #allocation3 [shape = 'u8[1024]{0}', space=smem, size = 0x400, scoped, tag = 'input window, operand 0, single buffered']
    #allocation4 [shape = 's32[2]{0}', space=sflag, size = 0x8, scoped, tag = 'scoped memory for tpu_custom_call.1']
    #allocation5 [shape = 's32[2]{0}', space=sflag, size = 0x8, scoped, tag = 'scoped memory for tpu_custom_call.1']
    #allocation6 [shape = 's32[2]{0}', space=sflag, size = 0x8, scoped, tag = 'scoped memory for tpu_custom_call.1']
    #allocation7 [shape = 's32[2]{0}', space=sflag, size = 0x8, scoped, tag = 'scoped memory for tpu_custom_call.1']
    #allocation8 [shape = 'u8[512]{0}', space=smem, size = 0x200, scoped, tag = 'input window, operand 1, single buffered']
    #allocation9 [shape = 'u8[16384]{0}', space=vmem, size = 0x4000, scoped, tag = 'input window, operand 7, single buffered']
    #allocation10 [shape = 'u8[32768]{0}', space=vmem, size = 0x8000, scoped, tag = 'input window, operand 10']
    #allocation11 [shape = 's32[2]{0}', space=sflag, size = 0x8, scoped, tag = 'scoped memory for tpu_custom_call.1']
    #allocation12 [shape = 'u8[1024]{0}', space=vmem, size = 0x400, scoped, tag = 'output window, operand 0']
    %17 = vsyncpa [#allocation7], 0
    %18 = vsyncpa [#allocation6], 0
    %19 = vsyncpa [#allocation4], 0
    %20 = vsyncpa [#allocation11], 0
    %s21 = scalar_lea.sflag [#allocation11], 1
    %22 = vsyncpa %s21, 0
    %23 = vsyncpa [#allocation5], 0
    %s24 = scalar_lea.sflag [#allocation5], 1
    %25 = vsyncpa %s24, 0
    loop: start=0, step=1, limit=4
    $region2: #{tpu_custom_call.1} parent=1 // loop_pre_header
      _
    $region3: #{tpu_custom_call.1} parent=1 // loop_header
      %s27 = sphi 0, %s31
      %p28 = scmp.ge.s32.totalorder %s27, 4
      %s35 = sphi 0, %s35
      %s37 = sphi 0, %s35
      %s38 = sphi 0, %s37
      %s52 = sphi 0, %s38
      %s56 = sphi 0, %s56
      %s58 = sphi 0, %s56
      %s59 = sphi 0, %s58
      %s73 = sphi 0, %s59
      %s77 = sphi 0, %s77
      %s79 = sphi 0, %s77
      %s80 = sphi 0, %s79
      %s94 = sphi 0, %s80
      %s98 = sphi 0, %s98
      %s100 = sphi 0, %s98
      %s101 = sphi 0, %s100
      %s115 = sphi 0, %s101
      %s121 = sphi 0, %s123
      %s124 = sphi 0, %s121
      %s125 = sphi 0, %s124
      %s141 = sphi 0, %s125
      %s145 = sphi 0, %s145
      %s147 = sphi 0, %s145
      %s148 = sphi 0, %s147
      %s162 = sphi 0, %s148
      %s166 = sphi 0, %s166
      %s168 = sphi 0, %s166
      %s169 = sphi 0, %s168
      %s183 = sphi 0, %s169
      %s187 = sphi 0, %s187
      %s189 = sphi 0, %s187
      %s190 = sphi 0, %s189
      %s204 = sphi 0, %s190
      %s208 = sphi 0, %s208
      %s210 = sphi 0, %s208
      %s211 = sphi 0, %s210
      %s225 = sphi 0, %s211
      %s229 = sphi 0, %s229
      %s231 = sphi 0, %s229
      %s232 = sphi 0, %s231
      %s246 = sphi 0, %s232
      %s252 = sphi 0, %s254
      %s255 = sphi 0, %s252
      %s256 = sphi 0, %s255
      %s272 = sphi 0, %s256
      %s278 = sphi 0, %s280
      %s281 = sphi 0, %s278
      %s282 = sphi 0, %s281
      %s298 = sphi 0, %s282
    $region4: #{tpu_custom_call.1} parent=1 // loop_header_branch
      %30 = sbr.rel (%p28) target = $region8
    $region5: #{tpu_custom_call.1} parent=1 // loop_body
      %s32 = ssub.s32 %s27, 1
      %s33 = ssub.s32 %s27, 2
      %s34 = sadd.s32 %s27, 1
      %s36 = sadd.s32 %s35, 1
      %p39 = scmp.eq.s32.totalorder %s27, 1
      %p40 = scmp.ne.s32.totalorder %s35, %s37
      %p41 = scmp.eq.s32.totalorder %s27, 0
      %p42 = por %p40, %p41
      %p43 = scmp.ne.s32.totalorder %s35, %s37
      %p44 = scmp.eq.s32.totalorder %s32, 1
      %p45 = por %p43, %p44
      %p46 = scmp.ne.s32.totalorder %s37, %s38
      %p47 = scmp.eq.s32.totalorder %s32, 0
      %p48 = por %p46, %p47
      %p49 = scmp.ne.s32.totalorder %s37, %s38
      %p50 = scmp.eq.s32.totalorder %s33, 1
      %p51 = por %p49, %p50
      %p53 = scmp.ne.s32.totalorder %s38, %s52
      %p54 = scmp.eq.s32.totalorder %s33, 0
      %p55 = por %p53, %p54
      %s57 = sadd.s32 %s56, 1
      %p60 = scmp.eq.s32.totalorder %s27, 1
      %p61 = scmp.ne.s32.totalorder %s56, %s58
      %p62 = scmp.eq.s32.totalorder %s27, 0
      %p63 = por %p61, %p62
      %p64 = scmp.ne.s32.totalorder %s56, %s58
      %p65 = scmp.eq.s32.totalorder %s32, 1
      %p66 = por %p64, %p65
      %p67 = scmp.ne.s32.totalorder %s58, %s59
      %p68 = scmp.eq.s32.totalorder %s32, 0
      %p69 = por %p67, %p68
      %p70 = scmp.ne.s32.totalorder %s58, %s59
      %p71 = scmp.eq.s32.totalorder %s33, 1
      %p72 = por %p70, %p71
      %p74 = scmp.ne.s32.totalorder %s59, %s73
      %p75 = scmp.eq.s32.totalorder %s33, 0
      %p76 = por %p74, %p75
      %s78 = sadd.s32 %s77, 1
      %p81 = scmp.eq.s32.totalorder %s27, 1
      %p82 = scmp.ne.s32.totalorder %s77, %s79
      %p83 = scmp.eq.s32.totalorder %s27, 0
      %p84 = por %p82, %p83
      %p85 = scmp.ne.s32.totalorder %s77, %s79
      %p86 = scmp.eq.s32.totalorder %s32, 1
      %p87 = por %p85, %p86
      %p88 = scmp.ne.s32.totalorder %s79, %s80
      %p89 = scmp.eq.s32.totalorder %s32, 0
      %p90 = por %p88, %p89
      %p91 = scmp.ne.s32.totalorder %s79, %s80
      %p92 = scmp.eq.s32.totalorder %s33, 1
      %p93 = por %p91, %p92
      %p95 = scmp.ne.s32.totalorder %s80, %s94
      %p96 = scmp.eq.s32.totalorder %s33, 0
      %p97 = por %p95, %p96
      %s99 = sadd.s32 %s98, 1
      %p102 = scmp.eq.s32.totalorder %s27, 1
      %p103 = scmp.ne.s32.totalorder %s98, %s100
      %p104 = scmp.eq.s32.totalorder %s27, 0
      %p105 = por %p103, %p104
      %p106 = scmp.ne.s32.totalorder %s98, %s100
      %p107 = scmp.eq.s32.totalorder %s32, 1
      %p108 = por %p106, %p107
      %p109 = scmp.ne.s32.totalorder %s100, %s101
      %p110 = scmp.eq.s32.totalorder %s32, 0
      %p111 = por %p109, %p110
      %p112 = scmp.ne.s32.totalorder %s100, %s101
      %p113 = scmp.eq.s32.totalorder %s33, 1
      %p114 = por %p112, %p113
      %p116 = scmp.ne.s32.totalorder %s101, %s115
      %p117 = scmp.eq.s32.totalorder %s33, 0
      %p118 = por %p116, %p117
      %s119 = ssub.s32 %s27, %s34
      %p120 = scmp.eq.s32.totalorder %s119, 0
      %s122 = sadd.s32 %s121, 1
      %s123 = scalar_select %p120, %s121, %s122
      %p126 = pneg %p120
      %p127 = scmp.eq.s32.totalorder %s27, 1
      %p128 = por %p126, %p127
      %p129 = scmp.ne.s32.totalorder %s121, %s124
      %p130 = scmp.eq.s32.totalorder %s27, 0
      %p131 = por %p129, %p130
      %p132 = scmp.ne.s32.totalorder %s121, %s124
      %p133 = scmp.eq.s32.totalorder %s32, 1
      %p134 = por %p132, %p133
      %p135 = scmp.ne.s32.totalorder %s124, %s125
      %p136 = scmp.eq.s32.totalorder %s32, 0
      %p137 = por %p135, %p136
      %p138 = scmp.ne.s32.totalorder %s124, %s125
      %p139 = scmp.eq.s32.totalorder %s33, 1
      %p140 = por %p138, %p139
      %p142 = scmp.ne.s32.totalorder %s125, %s141
      %p143 = scmp.eq.s32.totalorder %s33, 0
      %p144 = por %p142, %p143
      %s146 = sadd.s32 %s145, 1
      %p149 = scmp.eq.s32.totalorder %s27, 1
      %p150 = scmp.ne.s32.totalorder %s145, %s147
      %p151 = scmp.eq.s32.totalorder %s27, 0
      %p152 = por %p150, %p151
      %p153 = scmp.ne.s32.totalorder %s145, %s147
      %p154 = scmp.eq.s32.totalorder %s32, 1
      %p155 = por %p153, %p154
      %p156 = scmp.ne.s32.totalorder %s147, %s148
      %p157 = scmp.eq.s32.totalorder %s32, 0
      %p158 = por %p156, %p157
      %p159 = scmp.ne.s32.totalorder %s147, %s148
      %p160 = scmp.eq.s32.totalorder %s33, 1
      %p161 = por %p159, %p160
      %p163 = scmp.ne.s32.totalorder %s148, %s162
      %p164 = scmp.eq.s32.totalorder %s33, 0
      %p165 = por %p163, %p164
      %s167 = sadd.s32 %s166, 1
      %p170 = scmp.eq.s32.totalorder %s27, 1
      %p171 = scmp.ne.s32.totalorder %s166, %s168
      %p172 = scmp.eq.s32.totalorder %s27, 0
      %p173 = por %p171, %p172
      %p174 = scmp.ne.s32.totalorder %s166, %s168
      %p175 = scmp.eq.s32.totalorder %s32, 1
      %p176 = por %p174, %p175
      %p177 = scmp.ne.s32.totalorder %s168, %s169
      %p178 = scmp.eq.s32.totalorder %s32, 0
      %p179 = por %p177, %p178
      %p180 = scmp.ne.s32.totalorder %s168, %s169
      %p181 = scmp.eq.s32.totalorder %s33, 1
      %p182 = por %p180, %p181
      %p184 = scmp.ne.s32.totalorder %s169, %s183
      %p185 = scmp.eq.s32.totalorder %s33, 0
      %p186 = por %p184, %p185
      %s188 = sadd.s32 %s187, 1
      %p191 = scmp.eq.s32.totalorder %s27, 1
      %p192 = scmp.ne.s32.totalorder %s187, %s189
      %p193 = scmp.eq.s32.totalorder %s27, 0
      %p194 = por %p192, %p193
      %p195 = scmp.ne.s32.totalorder %s187, %s189
      %p196 = scmp.eq.s32.totalorder %s32, 1
      %p197 = por %p195, %p196
      %p198 = scmp.ne.s32.totalorder %s189, %s190
      %p199 = scmp.eq.s32.totalorder %s32, 0
      %p200 = por %p198, %p199
      %p201 = scmp.ne.s32.totalorder %s189, %s190
      %p202 = scmp.eq.s32.totalorder %s33, 1
      %p203 = por %p201, %p202
      %p205 = scmp.ne.s32.totalorder %s190, %s204
      %p206 = scmp.eq.s32.totalorder %s33, 0
      %p207 = por %p205, %p206
      %s209 = sadd.s32 %s208, 1
      %p212 = scmp.eq.s32.totalorder %s27, 1
      %p213 = scmp.ne.s32.totalorder %s208, %s210
      %p214 = scmp.eq.s32.totalorder %s27, 0
      %p215 = por %p213, %p214
      %p216 = scmp.ne.s32.totalorder %s208, %s210
      %p217 = scmp.eq.s32.totalorder %s32, 1
      %p218 = por %p216, %p217
      %p219 = scmp.ne.s32.totalorder %s210, %s211
      %p220 = scmp.eq.s32.totalorder %s32, 0
      %p221 = por %p219, %p220
      %p222 = scmp.ne.s32.totalorder %s210, %s211
      %p223 = scmp.eq.s32.totalorder %s33, 1
      %p224 = por %p222, %p223
      %p226 = scmp.ne.s32.totalorder %s211, %s225
      %p227 = scmp.eq.s32.totalorder %s33, 0
      %p228 = por %p226, %p227
      %s230 = sadd.s32 %s229, 1
      %p233 = scmp.eq.s32.totalorder %s27, 1
      %p234 = scmp.ne.s32.totalorder %s229, %s231
      %p235 = scmp.eq.s32.totalorder %s27, 0
      %p236 = por %p234, %p235
      %p237 = scmp.ne.s32.totalorder %s229, %s231
      %p238 = scmp.eq.s32.totalorder %s32, 1
      %p239 = por %p237, %p238
      %p240 = scmp.ne.s32.totalorder %s231, %s232
      %p241 = scmp.eq.s32.totalorder %s32, 0
      %p242 = por %p240, %p241
      %p243 = scmp.ne.s32.totalorder %s231, %s232
      %p244 = scmp.eq.s32.totalorder %s33, 1
      %p245 = por %p243, %p244
      %p247 = scmp.ne.s32.totalorder %s232, %s246
      %p248 = scmp.eq.s32.totalorder %s33, 0
      %p249 = por %p247, %p248
      %s250 = ssub.s32 %s27, %s34
      %p251 = scmp.eq.s32.totalorder %s250, 0
      %s253 = sadd.s32 %s252, 1
      %s254 = scalar_select %p251, %s252, %s253
      %p257 = pneg %p251
      %p258 = scmp.eq.s32.totalorder %s27, 1
      %p259 = por %p257, %p258
      %p260 = scmp.ne.s32.totalorder %s252, %s255
      %p261 = scmp.eq.s32.totalorder %s27, 0
      %p262 = por %p260, %p261
      %p263 = scmp.ne.s32.totalorder %s252, %s255
      %p264 = scmp.eq.s32.totalorder %s32, 1
      %p265 = por %p263, %p264
      %p266 = scmp.ne.s32.totalorder %s255, %s256
      %p267 = scmp.eq.s32.totalorder %s32, 0
      %p268 = por %p266, %p267
      %p269 = scmp.ne.s32.totalorder %s255, %s256
      %p270 = scmp.eq.s32.totalorder %s33, 1
      %p271 = por %p269, %p270
      %p273 = scmp.ne.s32.totalorder %s256, %s272
      %p274 = scmp.eq.s32.totalorder %s33, 0
      %p275 = por %p273, %p274
      %s276 = ssub.s32 %s27, %s34
      %p277 = scmp.eq.s32.totalorder %s276, 0
      %s279 = sadd.s32 %s278, 1
      %s280 = scalar_select %p277, %s278, %s279
      %p283 = pneg %p277
      %p284 = scmp.eq.s32.totalorder %s27, 1
      %p285 = por %p283, %p284
      %p286 = scmp.ne.s32.totalorder %s278, %s281
      %p287 = scmp.eq.s32.totalorder %s27, 0
      %p288 = por %p286, %p287
      %p289 = scmp.ne.s32.totalorder %s278, %s281
      %p290 = scmp.eq.s32.totalorder %s32, 1
      %p291 = por %p289, %p290
      %p292 = scmp.ne.s32.totalorder %s281, %s282
      %p293 = scmp.eq.s32.totalorder %s32, 0
      %p294 = por %p292, %p293
      %p295 = scmp.ne.s32.totalorder %s281, %s282
      %p296 = scmp.eq.s32.totalorder %s33, 1
      %p297 = por %p295, %p296
      %p299 = scmp.ne.s32.totalorder %s282, %s298
      %p300 = scmp.eq.s32.totalorder %s33, 0
      %p301 = por %p299, %p300
      %p302 = scmp.le.s32.totalorder 1, %s27
      %p303 = scmp.lt.s32.totalorder %s27, 3
      %p304 = pnand %p302, %p303
      %p305 = pneg %p304
      // Predicated region
      $region9: #{tpu_custom_call.1} parent=5 // pred_check
        _
      $region10: #{tpu_custom_call.1} parent=5 // pred_check_branch
        %307 = sbr.rel (%p304) target = $region12
      $region11: #{tpu_custom_call.1} parent=5 // pred_region
        %s308 = ssub.s32 %s27, 1
        // Predicated region
        $region13: #{tpu_custom_call.1} parent=11 // pred_check
          %p309 = pneg %p48
        $region14: #{tpu_custom_call.1} parent=11 // pred_check_branch
          %311 = sbr.rel (%p309) target = $region16
        $region15: #{tpu_custom_call.1} parent=11 // pred_region
          %s313 = ssub.s32 32, 32
          %314 = vsyncadd [#allocation7], %s313
          %s316 = sshll.u32 %s0, 4
          %s317 = int_to_ptr.vmem [resolvable:$true] %s316
          %319 = dma.vmem_to_smem %s317, 32, [#allocation3], [#allocation7]
        $region16: #{tpu_custom_call.1} parent=11 // pred_fallthru
          _
        // Predicated region
        $region17: #{tpu_custom_call.1} parent=11 // pred_check
          %p320 = pneg %p69
        $region18: #{tpu_custom_call.1} parent=11 // pred_check_branch
          %322 = sbr.rel (%p320) target = $region20
        $region19: #{tpu_custom_call.1} parent=11 // pred_region
          %s324 = ssub.s32 16, 16
          %325 = vsyncadd [#allocation6], %s324
          %328 = dma.hbm_to_smem %s1, 16, [#allocation8], [#allocation6]
        $region20: #{tpu_custom_call.1} parent=11 // pred_fallthru
          _
        // Predicated region
        $region21: #{tpu_custom_call.1} parent=11 // pred_check
          %p329 = pneg %p90
        $region22: #{tpu_custom_call.1} parent=11 // pred_check_branch
          %331 = sbr.rel (%p329) target = $region24
        $region23: #{tpu_custom_call.1} parent=11 // pred_region
          _
        $region24: #{tpu_custom_call.1} parent=11 // pred_fallthru
          _
        // Predicated region
        $region25: #{tpu_custom_call.1} parent=11 // pred_check
          %p332 = pneg %p111
        $region26: #{tpu_custom_call.1} parent=11 // pred_check_branch
          %334 = sbr.rel (%p332) target = $region28
        $region27: #{tpu_custom_call.1} parent=11 // pred_region
          _
        $region28: #{tpu_custom_call.1} parent=11 // pred_fallthru
          _
        // Predicated region
        $region29: #{tpu_custom_call.1} parent=11 // pred_check
          %p335 = pneg %p158
        $region30: #{tpu_custom_call.1} parent=11 // pred_check_branch
          %337 = sbr.rel (%p335) target = $region32
        $region31: #{tpu_custom_call.1} parent=11 // pred_region
          _
        $region32: #{tpu_custom_call.1} parent=11 // pred_fallthru
          _
        // Predicated region
        $region33: #{tpu_custom_call.1} parent=11 // pred_check
          %p338 = pneg %p179
        $region34: #{tpu_custom_call.1} parent=11 // pred_check_branch
          %340 = sbr.rel (%p338) target = $region36
        $region35: #{tpu_custom_call.1} parent=11 // pred_region
          _
        $region36: #{tpu_custom_call.1} parent=11 // pred_fallthru
          _
        // Predicated region
        $region37: #{tpu_custom_call.1} parent=11 // pred_check
          %p341 = pneg %p200
        $region38: #{tpu_custom_call.1} parent=11 // pred_check_branch
          %343 = sbr.rel (%p341) target = $region40
        $region39: #{tpu_custom_call.1} parent=11 // pred_region
          %s345 = ssub.s32 512, 512
          %346 = vsyncadd [#allocation4], %s345
          %s347 = sshll.u32 [#allocation9], 4
          %s348 = int_to_ptr.vmem [resolvable:$true] %s347
          %353 = dma.hbm_to_vmem [thread:$0]  %s7, 512, %s348, [#allocation4], 128, 128, 8
        $region40: #{tpu_custom_call.1} parent=11 // pred_fallthru
          _
        // Predicated region
        $region41: #{tpu_custom_call.1} parent=11 // pred_check
          %p354 = pneg %p221
        $region42: #{tpu_custom_call.1} parent=11 // pred_check_branch
          %356 = sbr.rel (%p354) target = $region44
        $region43: #{tpu_custom_call.1} parent=11 // pred_region
          _
        $region44: #{tpu_custom_call.1} parent=11 // pred_fallthru
          _
        // Predicated region
        $region45: #{tpu_custom_call.1} parent=11 // pred_check
          %p357 = pneg %p242
        $region46: #{tpu_custom_call.1} parent=11 // pred_check_branch
          %359 = sbr.rel (%p357) target = $region48
        $region47: #{tpu_custom_call.1} parent=11 // pred_region
          _
        $region48: #{tpu_custom_call.1} parent=11 // pred_fallthru
          _
      $region12: #{tpu_custom_call.1} parent=5 // pred_fallthru
        _
      %p360 = scmp.lt.s32.totalorder %s27, 2
      // Predicated region
      $region49: #{tpu_custom_call.1} parent=5 // pred_check
        %p361 = pneg %p360
      $region50: #{tpu_custom_call.1} parent=5 // pred_check_branch
        %363 = sbr.rel (%p361) target = $region52
      $region51: #{tpu_custom_call.1} parent=5 // pred_region
        // Predicated region
        $region53: #{tpu_custom_call.1} parent=51 // pred_check
          %p364 = pneg %p131
        $region54: #{tpu_custom_call.1} parent=51 // pred_check_branch
          %366 = sbr.rel (%p364) target = $region56
        $region55: #{tpu_custom_call.1} parent=51 // pred_region
          %p367 = scmp.lt.s32.totalorder %s27, 1
          %s368 = scalar_select %p367, %s27, 1
          %s369 = smul.addr %s368, 2
          %s370 = scalar_lea.vmem %s4, %s369
        $region56: #{tpu_custom_call.1} parent=51 // pred_fallthru
          _
        // Predicated region
        $region57: #{tpu_custom_call.1} parent=51 // pred_check
          %p371 = pneg %p262
        $region58: #{tpu_custom_call.1} parent=51 // pred_check_branch
          %373 = sbr.rel (%p371) target = $region60
        $region59: #{tpu_custom_call.1} parent=51 // pred_region
          %s374 = sand.u32 %s252, 1
          %s375 = scalar_lea.sflag [#allocation11], %s374
          %s376 = sand.u32 %s252, 1
          %s377 = smul.addr %s376, 32
          %s378 = scalar_lea.vmem [#allocation10], %s377
          %s380 = ssub.s32 512, 512
          %381 = vsyncadd %s375, %s380
          %s382 = smul.addr %s27, 4
          %s383 = smul.addr %s382, 128
          %s384 = scalar_lea.hbm %s10, %s383
          %s385 = sshll.u32 %s378, 4
          %s386 = int_to_ptr.vmem [resolvable:$true] %s385
          %391 = dma.hbm_to_vmem [thread:$0]  %s384, 512, %s386, %s375, 128, 128, 8
        $region60: #{tpu_custom_call.1} parent=51 // pred_fallthru
          _
      $region52: #{tpu_custom_call.1} parent=5 // pred_fallthru
        _
      %p392 = scmp.le.s32.totalorder 1, %s27
      %p393 = scmp.lt.s32.totalorder %s27, 3
      %p394 = pnand %p392, %p393
      %p395 = pneg %p394
      // Predicated region
      $region61: #{tpu_custom_call.1} parent=5 // pred_check
        _
      $region62: #{tpu_custom_call.1} parent=5 // pred_check_branch
        %397 = sbr.rel (%p394) target = $region64
      $region63: #{tpu_custom_call.1} parent=5 // pred_region
        %s398 = ssub.s32 %s27, 1
        // Predicated region
        $region65: #{tpu_custom_call.1} parent=63 // pred_check
          %p399 = pneg %p48
        $region66: #{tpu_custom_call.1} parent=63 // pred_check_branch
          %401 = sbr.rel (%p399) target = $region68
        $region67: #{tpu_custom_call.1} parent=63 // pred_region
          %402 = dma.done [#allocation7], 32
        $region68: #{tpu_custom_call.1} parent=63 // pred_fallthru
          _
        // Predicated region
        $region69: #{tpu_custom_call.1} parent=63 // pred_check
          %p403 = pneg %p69
        $region70: #{tpu_custom_call.1} parent=63 // pred_check_branch
          %405 = sbr.rel (%p403) target = $region72
        $region71: #{tpu_custom_call.1} parent=63 // pred_region
          %406 = dma.done [#allocation6], 16
        $region72: #{tpu_custom_call.1} parent=63 // pred_fallthru
          _
        // Predicated region
        $region73: #{tpu_custom_call.1} parent=63 // pred_check
          %p407 = pneg %p200
        $region74: #{tpu_custom_call.1} parent=63 // pred_check_branch
          %409 = sbr.rel (%p407) target = $region76
        $region75: #{tpu_custom_call.1} parent=63 // pred_region
          %410 = dma.done [#allocation4], 512
        $region76: #{tpu_custom_call.1} parent=63 // pred_fallthru
          _
        %s411 = sand.u32 %s255, 1
        %s412 = scalar_lea.sflag [#allocation11], %s411
        %s413 = sand.u32 %s255, 1
        %s414 = smul.addr %s413, 32
        %s415 = scalar_lea.vmem [#allocation10], %s414
        // Predicated region
        $region77: #{tpu_custom_call.1} parent=63 // pred_check
          %p416 = pneg %p268
        $region78: #{tpu_custom_call.1} parent=63 // pred_check_branch
          %418 = sbr.rel (%p416) target = $region80
        $region79: #{tpu_custom_call.1} parent=63 // pred_region
          %419 = dma.done %s412, 512
        $region80: #{tpu_custom_call.1} parent=63 // pred_fallthru
          _
        %420 = sfence
        %p421 = pneg %p48
        %p422 = pneg %p45
        %p423 = pneg %p69
        %p424 = pneg %p66
        %p425 = pneg %p90
        %p426 = pneg %p87
        %p427 = pneg %p111
        %p428 = pneg %p108
        %p429 = scmp.lt.s32.totalorder %s32, 1
        %s430 = scalar_select %p429, %s32, 1
        %s431 = smul.addr %s430, 2
        %s432 = scalar_lea.vmem %s4, %s431
        %p433 = pneg %p137
        %p434 = pneg %p134
        %p435 = pneg %p158
        %p436 = pneg %p155
        %p437 = pneg %p179
        %p438 = pneg %p176
        %p439 = pneg %p200
        %p440 = pneg %p197
        %p441 = pneg %p221
        %p442 = pneg %p218
        %p443 = pneg %p242
        %p444 = pneg %p239
        %s445 = sand.u32 %s255, 1
        %s446 = scalar_lea.sflag [#allocation11], %s445
        %s447 = sand.u32 %s255, 1
        %s448 = smul.addr %s447, 32
        %s449 = scalar_lea.vmem [#allocation10], %s448
        %p450 = pneg %p268
        %p451 = pneg %p265
        %p452 = pneg %p294
        %p453 = pneg %p291
        %s454 = sand.u32 %s281, 1
        %s455 = scalar_lea.sflag [#allocation5], %s454
        %s456 = sand.u32 %s281, 1
        %s457 = scalar_lea.vmem [#allocation12], %s456
        %p458 = scmp.lt.s32.totalorder %s32, 1
        %s459 = scalar_select %p458, %s32, 1
        %s460 = smul.addr %s459, 2
        %s461 = scalar_lea.vmem %s4, %s460
        %v462 = vld [vmem:[%s3] sm:$0x77]
        %s463 = smul.u32 %s32, 128
        %s464 = sld [smem:[#allocation3 + %s463]]
        %v465 = vstv %s464
        %v466 = vmul.f32 %v465, %v462
        %s467 = sadd.s32 %s463, 3
        %s468 = sld [smem:[#allocation3 + %s467]]
        %v469 = vstv %s468
        %v470 = vmul.f32 %v469, %v462
        %v472 = vrot.slane %v470, 5
        %v473 = vrot.slane %v472, 4
        %v475 = vadd.f32 %v466, %v473
        %s476 = sadd.s32 %s463, 6
        %s477 = sld [smem:[#allocation3 + %s476]]
        %v478 = vstv %s477
        %v479 = vmul.f32 %v478, %v462
        %v481 = vrot.slane %v479, 6
        %v482 = vrot.slane %v481, 4
        %v484 = vadd.f32 %v475, %v482
        %s485 = sadd.s32 %s463, 9
        %s486 = sld [smem:[#allocation3 + %s485]]
        %v487 = vstv %s486
        %v488 = vadd.f32 %v484, %v487
        %s489 = sadd.s32 %s463, 1
        %s490 = sld [smem:[#allocation3 + %s489]]
        %v491 = vstv %s490
        %v492 = vmul.f32 %v491, %v462
        %s493 = sadd.s32 %s463, 4
        %s494 = sld [smem:[#allocation3 + %s493]]
        %v495 = vstv %s494
        %v496 = vmul.f32 %v495, %v462
        %v498 = vrot.slane %v496, 5
        %v499 = vrot.slane %v498, 4
        %v501 = vadd.f32 %v492, %v499
        %s502 = sadd.s32 %s463, 7
        %s503 = sld [smem:[#allocation3 + %s502]]
        %v504 = vstv %s503
        %v505 = vmul.f32 %v504, %v462
        %v507 = vrot.slane %v505, 6
        %v508 = vrot.slane %v507, 4
        %v510 = vadd.f32 %v501, %v508
        %s511 = sadd.s32 %s463, 10
        %s512 = sld [smem:[#allocation3 + %s511]]
        %v513 = vstv %s512
        %v514 = vadd.f32 %v510, %v513
        %s515 = sadd.s32 %s463, 2
        %s516 = sld [smem:[#allocation3 + %s515]]
        %v517 = vstv %s516
        %v518 = vmul.f32 %v517, %v462
        %s519 = sadd.s32 %s463, 5
        %s520 = sld [smem:[#allocation3 + %s519]]
        %v521 = vstv %s520
        %v522 = vmul.f32 %v521, %v462
        %v524 = vrot.slane %v522, 5
        %v525 = vrot.slane %v524, 4
        %v527 = vadd.f32 %v518, %v525
        %s528 = sadd.s32 %s463, 8
        %s529 = sld [smem:[#allocation3 + %s528]]
        %v530 = vstv %s529
        %v531 = vmul.f32 %v530, %v462
        %v533 = vrot.slane %v531, 6
        %v534 = vrot.slane %v533, 4
        %v536 = vadd.f32 %v527, %v534
        %s537 = sadd.s32 %s463, 11
        %s538 = sld [smem:[#allocation3 + %s537]]
        %v539 = vstv %s538
        %v540 = vadd.f32 %v536, %v539
        %v541 = vld [vmem:[%s461] sm:$0x3]
        %v542 = vld [vmem:[%s5] sm:$0x3]
        %v543 = vmul.f32 %v542, %v541
        %v544 = vld [vmem:[%s6] sm:$0x3]
        %v545 = vmul.f32 %v543, %v544
        %v547 = vlaneseq
        %v548 = vshrl.u32 %v547, 7
        %v549 = vsub.s32 0, %v548
        %v550 = vrot.slane %v545, %v549
        %v551 = vlaneseq
        %v552 = vshrl.u32 %v551, 7
        %v553 = vsub.s32 1, %v552
        %v554 = vrot.slane %v545, %v553
        %vm557 = vcmask 1040384
        %v558 = vsel %vm557, %v550, 0.0
        %v559 = vsel %vm557, %v554, 0.0
        %v560 = vadd.f32 %v558, %v559
        %561 = vadd.xlane.f32.xlu0 %v560
        %v562 = vpop.xlane.xlu0 %561
        %v564 = vlaneseq
        %v565 = vshrl.u32 %v564, 7
        %v566 = vsub.s32 0, %v565
        %v567 = vrot.slane %v543, %v566
        %v568 = vlaneseq
        %v569 = vshrl.u32 %v568, 7
        %v570 = vsub.s32 1, %v569
        %v571 = vrot.slane %v543, %v570
        %v574 = vsel %vm557, %v567, 0.0
        %v575 = vsel %vm557, %v571, 0.0
        %v576 = vadd.f32 %v574, %v575
        %577 = vadd.xlane.f32.xlu0 %v576
        %v578 = vpop.xlane.xlu0 %577
        %s579 = sld [smem:[#allocation2]]
        %v580 = vstv %s579
        %v581 = vadd.f32 %v578, %v580
        %v582 = vsub.f32 %v581, %v562
        %v583 = vadd.f32 %v582, 1e-06
        %v584 = vrcp.pop %v583
        %v585 = vmul.f32 %v562, %v584
        %v586 = vld [vmem:[#allocation9] sm:$0xff]
        %v587 = vld [vmem:[#allocation9 + $0x8] sm:$0xff]
        %v588 = vld [vmem:[#allocation9 + $0x10] sm:$0xff]
        %v589 = vld [vmem:[#allocation9 + $0x18] sm:$0xff]
        %v590 = vld [vmem:[%s415] sm:$0xff]
        %v591 = vld [vmem:[%s415 + $0x8] sm:$0xff]
        %v592 = vld [vmem:[%s415 + $0x10] sm:$0xff]
        %v593 = vld [vmem:[%s415 + $0x18] sm:$0xff]
        %v594 = vmul.f32 %v586, %v590
        %v595 = vmul.f32 %v587, %v591
        %v596 = vmul.f32 %v588, %v592
        %v597 = vmul.f32 %v589, %v593
        %vm598 = vcmask 523264
        %v599 = vsel %vm598, %v594, 0.0
        %v600 = vsel %vm598, %v595, 0.0
        %v601 = vadd.f32 %v599, %v600
        %v602 = vsel %vm598, %v596, 0.0
        %v603 = vadd.f32 %v601, %v602
        %v604 = vsel %vm598, %v597, 0.0
        %v605 = vadd.f32 %v603, %v604
        %v606 = vrot.slane %v605, 4
        %v607 = vadd.f32 %v605, %v606
        %v608 = vrot.slane %v607, 2
        %v609 = vadd.f32 %v607, %v608
        %v610 = vrot.slane %v609, 1
        %v611 = vadd.f32 %v609, %v610
        %v612 = vmul.f32 %v590, %v590
        %v613 = vmul.f32 %v591, %v591
        %v614 = vmul.f32 %v592, %v592
        %v615 = vmul.f32 %v593, %v593
        %v616 = vsel %vm598, %v612, 0.0
        %v617 = vsel %vm598, %v613, 0.0
        %v618 = vadd.f32 %v616, %v617
        %v619 = vsel %vm598, %v614, 0.0
        %v620 = vadd.f32 %v618, %v619
        %v621 = vsel %vm598, %v615, 0.0
        %v622 = vadd.f32 %v620, %v621
        %v623 = vrot.slane %v622, 4
        %v624 = vadd.f32 %v622, %v623
        %v625 = vrot.slane %v624, 2
        %v626 = vadd.f32 %v624, %v625
        %v627 = vrot.slane %v626, 1
        %v628 = vadd.f32 %v626, %v627
        %v629 = vrsqrt.pop %v628
        %v630 = vmul.f32 %v628, %v629
        %vm631 = vcmp.eq.f32.partialorder %v628, inf
        %v632 = vsel %vm631, %v628, %v630
        %vm633 = vcmp.eq.f32.partialorder %v628, 0.0
        %v634 = vand.u32 %v628, 2147483648
        %v635 = vsel %vm633, %v634, %v632
        %v636 = vld [vmem:[%s8] sm:$0x1]
        %v637 = vmul.f32 %v636, %v635
        %v638 = vadd.f32 %v637, 1e-06
        %v639 = vrcp.pop %v638
        %v640 = vmul.f32 %v611, %v639
        %v641 = vld [vmem:[%s9] sm:$0x1]
        %v642 = vsub.f32 1.0, %v640
        %v643 = vmul.f32 %v641, %v642
        %vm644 = vcmask 516096
        %v645 = vsel %vm644, %v643, 0.0
        %646 = vadd.xlane.f32.xlu0 %v645
        %v647 = vpop.xlane.xlu0 %646
        %v648 = vadd.f32 %v540, 1e-09
        %v649 = vrcp.pop %v648
        %v650 = vmul.f32 %v488, %v649
        %v651 = vmul.f32 %v514, %v649
        %s652 = sld [smem:[#allocation8]]
        %v653 = vstv %s652
        %v654 = vmul.f32 %v653, %v650
        %s655 = sld [smem:[#allocation8 + $0x1]]
        %v656 = vstv %s655
        %v657 = vmul.f32 %v656, %v651
        %v658 = vadd.f32 %v654, %v657
        %s659 = sld [smem:[#allocation8 + $0x2]]
        %v660 = vstv %s659
        %v661 = vadd.f32 %v658, %v660
        %s662 = sld [smem:[#allocation8 + $0x3]]
        %v663 = vstv %s662
        %v664 = vmul.f32 %v663, %v650
        %s665 = sld [smem:[#allocation8 + $0x4]]
        %v666 = vstv %s665
        %v667 = vmul.f32 %v666, %v651
        %v668 = vadd.f32 %v664, %v667
        %s669 = sld [smem:[#allocation8 + $0x5]]
        %v670 = vstv %s669
        %v671 = vadd.f32 %v668, %v670
        %v672 = vsub.f32 1.0, %v671
        %v673 = vsub.f32 %v661, 0.5
        %v674 = vmul.f32 %v673, 2.0
        %v675 = vsub.f32 %v672, 0.5
        %v676 = vmul.f32 %v675, 2.0
        %v677 = vsub.f32 %v674, 1.0
        %v678 = vmax.f32 %v677, 0.0
        %v679 = vsub.f32 %v676, 1.0
        %v680 = vmax.f32 %v679, 0.0
        %v681 = vadd.f32 %v678, %v680
        %v682 = vsub.f32 -1.0, %v674
        %v683 = vmax.f32 %v682, 0.0
        %v684 = vadd.f32 %v681, %v683
        %v685 = vsub.f32 -1.0, %v676
        %v686 = vmax.f32 %v685, 0.0
        %v687 = vadd.f32 %v684, %v686
        %v688 = vsub.f32 0.0, %v540
        %v689 = vmax.f32 %v688, 0.0
        %v690 = vadd.f32 %v687, %v689
        %v691 = vsub.f32 %v540, 100.0
        %v692 = vmax.f32 %v691, 0.0
        %v693 = vadd.f32 %v690, %v692
        %v695 = vlaneseq
        %v696 = vshrl.u32 %v695, 7
        %v697 = vsub.s32 0, %v696
        %v698 = vrot.slane %v693, %v697
        %v699 = vlaneseq
        %v700 = vshrl.u32 %v699, 7
        %v701 = vsub.s32 4, %v700
        %v702 = vrot.slane %v693, %v701
        %v705 = vsel %vm557, %v698, 0.0
        %v706 = vsel %vm557, %v702, 0.0
        %v707 = vadd.f32 %v705, %v706
        %708 = vadd.xlane.f32.xlu0 %v707
        %v709 = vpop.xlane.xlu0 %708
        %v710 = vlaneseq
        %v711 = vand.u32 %v710, 127
        %vm712 = vcmp.eq.s32.totalorder %v711, 0
        %v713 = vsel %vm712, %v585, 0.0
        %vm714 = vcmp.eq.s32.totalorder %v711, 1
        %v715 = vsel %vm714, %v647, 0.0
        %v716 = vadd.f32 %v713, %v715
        %vm717 = vcmp.eq.s32.totalorder %v711, 2
        %v718 = vsel %vm717, %v709, 0.0
        %v719 = vadd.f32 %v716, %v718
        %720 = vst [vmem:[%s457] sm:$0x1] %v719
        %s721 = sand.u32 %s281, 1
        %s722 = scalar_lea.sflag [#allocation5], %s721
        %s723 = sand.u32 %s281, 1
        %s724 = scalar_lea.vmem [#allocation12], %s723
        // Predicated region
        $region81: #{tpu_custom_call.1} parent=63 // pred_check
          %p725 = pneg %p291
        $region82: #{tpu_custom_call.1} parent=63 // pred_check_branch
          %727 = sbr.rel (%p725) target = $region84
        $region83: #{tpu_custom_call.1} parent=63 // pred_region
          %s729 = ssub.s32 16, 16
          %730 = vsyncadd %s722, %s729
          %s731 = smul.addr %s32, 16
          %s732 = scalar_lea.hbm %s11, %s731
          %s734 = sshll.u32 %s724, 4
          %s735 = int_to_ptr.vmem [resolvable:$true] %s734
          %737 = dma.vmem_to_hbm [thread:$0]  %s735, 16, %s732, %s722
        $region84: #{tpu_custom_call.1} parent=63 // pred_fallthru
          _
      $region64: #{tpu_custom_call.1} parent=5 // pred_fallthru
        _
      %p738 = scmp.le.s32.totalorder 2, %s27
      // Predicated region
      $region85: #{tpu_custom_call.1} parent=5 // pred_check
        %p739 = pneg %p738
      $region86: #{tpu_custom_call.1} parent=5 // pred_check_branch
        %741 = sbr.rel (%p739) target = $region88
      $region87: #{tpu_custom_call.1} parent=5 // pred_region
        %s742 = ssub.s32 %s27, 2
        // Predicated region
        $region89: #{tpu_custom_call.1} parent=87 // pred_check
          %p743 = pneg %p297
        $region90: #{tpu_custom_call.1} parent=87 // pred_check_branch
          %745 = sbr.rel (%p743) target = $region92
        $region91: #{tpu_custom_call.1} parent=87 // pred_region
          %s746 = sand.u32 %s282, 1
          %s747 = scalar_lea.sflag [#allocation5], %s746
          %s748 = sand.u32 %s282, 1
          %s749 = scalar_lea.vmem [#allocation12], %s748
          %750 = dma.done %s747, 16
        $region92: #{tpu_custom_call.1} parent=87 // pred_fallthru
          _
      $region88: #{tpu_custom_call.1} parent=5 // pred_fallthru
        _
    $region6: #{tpu_custom_call.1} parent=1 // loop_footer
      %s31 = sadd.s32 1, %s27
    $region7: #{tpu_custom_call.1} parent=1 // loop_footer_branch
      %26 = sbr.rel target = $region3
    $region8: #{tpu_custom_call.1} parent=1 // loop_exit
      _
    %751 = vsyncpa [#allocation4], 1
    %s752 = scalar_lea.sflag [#allocation4], 1
    %753 = vsyncpa %s752, 1
    %754 = vsyncpa [#allocation11], 1
    %s755 = scalar_lea.sflag [#allocation11], 1
    %756 = vsyncpa %s755, 1
    %757 = vsyncpa [#allocation5], 1
    %s758 = scalar_lea.sflag [#allocation5], 1
    %759 = vsyncpa %s758, 1
    %760 = vsyncpa [#allocation6], 1
    %s761 = scalar_lea.sflag [#allocation6], 1
    %762 = vsyncpa %s761, 1
    %763 = vsyncpa [#allocation7], 1
    %s764 = scalar_lea.sflag [#allocation7], 1
    %765 = vsyncpa %s764, 1

</llo_original>
